<compile_context>
chip_gen: v5e
topology: v5e:2x2
jax: 0.10.0
libtpu: 0.0.40
codegen_flags: <defaults>
</compile_context>

<pallas_src>
import functools

import jax
import jax.numpy as jnp
from jax import lax
from jax.experimental import pallas as pl
from jax.experimental.pallas import tpu as pltpu


def _model_kernel(cnt_ref, denom_ref, emb_ref, w_ref, b_ref,
                  vec_ref, loss_ref, acc_ref):
    """Fused masked-mean pooling (V-tiled) + pooler + similarity + CE.

    Grid: (V // Vt,), the vocab reduction axis (marked "arbitrary").

    cnt_ref   : (2B, Vt) bf16  non-pad token-id counts, current vocab tile
    denom_ref : (2B, 1)  f32   non-pad token count per row (clamped >= 1)
    emb_ref   : (Vt, H)  bf16  embedding-table tile
    w_ref     : (H, H)   bf16  pooler weight
    b_ref     : (1, H)   f32   pooler bias
    vec_ref   : (2B, H)  f32   output [code_vec ; nl_vec]
    loss_ref  : (1, 1)   f32   SMEM scalar CE loss (mean reduction)
    acc_ref   : (2B, H)  f32   scratch: running counts @ emb accumulator
    """
    k = pl.program_id(0)

    @pl.when(k == 0)
    def _init():
        acc_ref[...] = jnp.zeros_like(acc_ref)

    # masked-mean pooling numerator on the MXU, one vocab tile at a time
    acc_ref[...] += jnp.dot(cnt_ref[...], emb_ref[...],
                            preferred_element_type=jnp.float32)

    @pl.when(k == pl.num_programs(0) - 1)
    def _finalize():
        bs = vec_ref.shape[0] // 2

        # exact reciprocal: EUP is nowhere near the bottleneck here
        pooled = acc_ref[...] * pl.reciprocal(denom_ref[...], approx=False)

        # pooler head: tanh(pooled @ W + b)   (MXU + EUP tanh)
        vec = jnp.tanh(
            jnp.dot(pooled.astype(jnp.bfloat16), w_ref[...],
                    preferred_element_type=jnp.float32) + b_ref[...])
        vec_ref[...] = vec                                          # (2B, H)

        vec_bf = vec.astype(jnp.bfloat16)
        code_vec = vec_bf[:bs]                                      # (B, H)
        nl_vec = vec_bf[bs:]                                        # (B, H)

        # scores[i, j] = sum_h nl[i, h] * code[j, h]  (contract lane dims)
        scores = lax.dot_general(
            nl_vec, code_vec,
            dimension_numbers=(((1,), (1,)), ((), ())),
            preferred_element_type=jnp.float32)                     # (B, B)

        # CrossEntropyLoss(scores, arange(B)), mean reduction
        m = jnp.max(scores, axis=-1, keepdims=True)                 # (B, 1)
        lse = m + jnp.log(jnp.sum(jnp.exp(scores - m),
                                  axis=-1, keepdims=True))          # (B, 1)
        # target logit from the SAME scores matrix (exact consistency)
        ri = lax.broadcasted_iota(jnp.int32, scores.shape, 0)
        ci = lax.broadcasted_iota(jnp.int32, scores.shape, 1)
        diag = jnp.sum(jnp.where(ri == ci, scores, 0.0),
                       axis=-1, keepdims=True)                      # (B, 1)

        loss_ref[0, 0] = jnp.sum(lse - diag) / jnp.float32(bs)


def model_forward(code_inputs, nl_inputs, emb_table, w_pool, b_pool,
                  *, v_tile=128):
    """Equivalent of Model.forward(code_inputs, nl_inputs) (return_vec=False)."""
    bs, _ = code_inputs.shape
    vocab, hidden = emb_table.shape
    rows = 2 * bs
    assert vocab % v_tile == 0

    # --- cheap glue in plain JAX --------------------------------------------
    inputs = jnp.concatenate([code_inputs, nl_inputs], axis=0)        # (2B, S)
    # scatter-add token-count matrix: no (2B, S, V) one-hot blow-up in HBM
    counts = jnp.zeros((rows, vocab), jnp.float32).at[
        jnp.arange(rows)[:, None], inputs].add(1.0)                   # (2B, V)
    counts = counts.at[:, 1].set(0.0)        # drop pad token (mask = id != 1)
    denom = jnp.maximum(counts.sum(axis=-1, keepdims=True), 1.0)      # (2B, 1)
    counts = counts.astype(jnp.bfloat16)     # counts <= S <= 256: exact in bf16

    # bf16 MXU operands from HBM (f32 accumulate inside the kernel)
    emb_bf = emb_table.astype(jnp.bfloat16)
    w_bf = w_pool.astype(jnp.bfloat16)

    # TODO(synk): the full transformer encoder (self-attention stack) is not
    # reproduced; masked-mean pooling + pooler head stands in for outputs[1].
    # TODO(synk): at real CodeBERT sizes on v5e, replace counts@emb with an
    # embedding-row gather (scalar-prefetch token ids + manual DMA) to avoid
    # reading the whole V x H table; and add a parallel row-grid axis so
    # v7x's second TensorCore is used once 2B grows.

    grid_spec = pltpu.PrefetchScalarGridSpec(
        num_scalar_prefetch=0,
        grid=(vocab // v_tile,),
        in_specs=[
            pl.BlockSpec((rows, v_tile), lambda k: (0, k)),      # counts tile
            pl.BlockSpec((rows, 1), lambda k: (0, 0)),           # denom
            pl.BlockSpec((v_tile, hidden), lambda k: (k, 0)),    # emb tile
            pl.BlockSpec((hidden, hidden), lambda k: (0, 0)),    # pooler W
            pl.BlockSpec((1, hidden), lambda k: (0, 0)),         # pooler b
        ],
        out_specs=(
            pl.BlockSpec((rows, hidden), lambda k: (0, 0)),      # vec (resident)
            pl.BlockSpec((1, 1), lambda k: (0, 0),
                         memory_space=pltpu.MemorySpace.SMEM),   # scalar loss
        ),
        scratch_shapes=[pltpu.VMEM((rows, hidden), jnp.float32)],
    )

    vec, loss = pl.pallas_call(
        _model_kernel,
        out_shape=(
            jax.ShapeDtypeStruct((rows, hidden), jnp.float32),
            jax.ShapeDtypeStruct((1, 1), jnp.float32),
        ),
        grid_spec=grid_spec,
        compiler_params=pltpu.CompilerParams(
            dimension_semantics=("arbitrary",),
            vmem_limit_bytes=64 * 1024 * 1024,
        ),
    )(counts, denom, emb_bf, w_bf, b_pool)

    code_vec = vec[:bs]
    nl_vec = vec[bs:]
    return loss[0, 0], code_vec, nl_vec


if __name__ == "__main__":
    # batch, seq, hidden, vocab, vocab tile (small, TPU-friendly; V tiled 4x)
    B, S, H, V, VT = 8, 16, 128, 512, 128

    key = jax.random.PRNGKey(0)
    k1, k2, k3, k4, k5 = jax.random.split(key, 5)

    # token ids; id 1 is the pad token (mask = inputs != 1)
    code_inputs = jax.random.randint(k1, (B, S), 0, V, dtype=jnp.int32)
    nl_inputs = jax.random.randint(k2, (B, S), 0, V, dtype=jnp.int32)
    # force some padding in the tails
    pad_cols = jnp.arange(S) >= (S - 3)
    code_inputs = jnp.where(pad_cols[None, :], 1, code_inputs)
    nl_inputs = jnp.where(pad_cols[None, :], 1, nl_inputs)

    # deterministic synthetic encoder parameters
    emb_table = jax.random.normal(k3, (V, H), dtype=jnp.float32) * 0.02
    w_pool = jax.random.normal(k4, (H, H), dtype=jnp.float32) * 0.02
    b_pool = jax.random.normal(k5, (1, H), dtype=jnp.float32) * 0.02

    fwd = jax.jit(functools.partial(model_forward, v_tile=VT))
    loss, code_vec, nl_vec = fwd(code_inputs, nl_inputs, emb_table, w_pool, b_pool)
    jax.block_until_ready((loss, code_vec, nl_vec))

    # sanity: shapes match the PyTorch module's outputs
    assert code_vec.shape == (B, H) and nl_vec.shape == (B, H)
    assert loss.shape == ()
    assert bool(jnp.isfinite(loss))

    print("KERNEL_OK")
</pallas_src>

<mosaic_0001>
module attributes {stable_mosaic.version = 11 : i64} {
  func.func @_model_kernel(%arg0: i32, %arg1: memref<16x128xbf16, #tpu.memory_space<vmem>>, %arg2: memref<16x1xf32, #tpu.memory_space<vmem>>, %arg3: memref<128x128xbf16, #tpu.memory_space<vmem>>, %arg4: memref<128x128xbf16, #tpu.memory_space<vmem>>, %arg5: memref<1x128xf32, #tpu.memory_space<vmem>>, %arg6: memref<16x128xf32, #tpu.memory_space<vmem>>, %arg7: memref<1x1xf32, #tpu.memory_space<smem>>, %arg8: memref<16x128xf32, #tpu.memory_space<vmem>>) attributes {dimension_semantics = [#tpu.dimension_semantics<arbitrary>], iteration_bounds = array<i64: 4>, scalar_prefetch = 0 : i64, scratch_operands = 1 : i64, tpu.core_type = #tpu.core_type<tc>, window_params = [{transform_indices = @transform_0, window_bounds = array<i64: 16, 128>}, {pipeline_mode = #tpu.pipeline_mode<synchronous>, transform_indices = @transform_1, window_bounds = array<i64: 16, 1>}, {transform_indices = @transform_2, window_bounds = array<i64: 128, 128>}, {pipeline_mode = #tpu.pipeline_mode<synchronous>, transform_indices = @transform_3, window_bounds = array<i64: 128, 128>}, {pipeline_mode = #tpu.pipeline_mode<synchronous>, transform_indices = @transform_4, window_bounds = array<i64: 1, 128>}, {pipeline_mode = #tpu.pipeline_mode<synchronous>, transform_indices = @transform_5, window_bounds = array<i64: 16, 128>}, {transform_indices = @transform_6, window_bounds = array<i64: 1, 1>}]} {
    %c0_i32 = arith.constant 0 : i32
    %0 = arith.cmpi eq, %arg0, %c0_i32 : i32
    %1 = arith.extui %0 : i1 to i32
    %c0_i32_0 = arith.constant 0 : i32
    %2 = arith.cmpi ne, %1, %c0_i32_0 : i32
    scf.if %2 {
      %cst_9 = arith.constant 0.000000e+00 : f32
      %12 = vector.broadcast %cst_9 : f32 to vector<16x128xf32>
      %c0_10 = arith.constant 0 : index
      %c0_11 = arith.constant 0 : index
      %13 = vector.load %arg8[%c0_10, %c0_11] : memref<16x128xf32, #tpu.memory_space<vmem>>, vector<16x128xf32>
      tpu.vector_store %arg8[%c0_10, %c0_11], %12 {strides = array<i32>} : memref<16x128xf32, #tpu.memory_space<vmem>>, vector<16x128xf32>,
    } else {
    }
    %c0 = arith.constant 0 : index
    %c0_1 = arith.constant 0 : index
    %3 = vector.load %arg8[%c0, %c0_1] : memref<16x128xf32, #tpu.memory_space<vmem>>, vector<16x128xf32>
    %c0_2 = arith.constant 0 : index
    %c0_3 = arith.constant 0 : index
    %4 = vector.load %arg1[%c0_2, %c0_3] : memref<16x128xbf16, #tpu.memory_space<vmem>>, vector<16x128xbf16>
    %c0_4 = arith.constant 0 : index
    %c0_5 = arith.constant 0 : index
    %5 = vector.load %arg3[%c0_4, %c0_5] : memref<128x128xbf16, #tpu.memory_space<vmem>>, vector<128x128xbf16>
    %cst = arith.constant dense<0.000000e+00> : vector<16x128xf32>
    %6 = tpu.matmul %4, %5, %cst {dimension_numbers = #tpu.dot_dimension_numbers<[1], [0], [0], [1], [0, 0, 1, 1], [], []>} : vector<16x128xbf16>, vector<128x128xbf16>, vector<16x128xf32> -> vector<16x128xf32>
    %7 = arith.addf %3, %6 : vector<16x128xf32>
    %c0_6 = arith.constant 0 : index
    %c0_7 = arith.constant 0 : index
    %8 = vector.load %arg8[%c0_6, %c0_7] : memref<16x128xf32, #tpu.memory_space<vmem>>, vector<16x128xf32>
    tpu.vector_store %arg8[%c0_6, %c0_7], %7 {strides = array<i32>} : memref<16x128xf32, #tpu.memory_space<vmem>>, vector<16x128xf32>,
    %c3_i32 = arith.constant 3 : i32
    %9 = arith.cmpi eq, %arg0, %c3_i32 : i32
    %10 = arith.extui %9 : i1 to i32
    %c0_i32_8 = arith.constant 0 : i32
    %11 = arith.cmpi ne, %10, %c0_i32_8 : i32
    scf.if %11 {
      %c0_9 = arith.constant 0 : index
      %c0_10 = arith.constant 0 : index
      %12 = vector.load %arg8[%c0_9, %c0_10] : memref<16x128xf32, #tpu.memory_space<vmem>>, vector<16x128xf32>
      %c0_11 = arith.constant 0 : index
      %c0_12 = arith.constant 0 : index
      %13 = vector.load %arg2[%c0_11, %c0_12] : memref<16x1xf32, #tpu.memory_space<vmem>>, vector<16x1xf32>
      %14 = tpu.reciprocal %13 : vector<16x1xf32> -> vector<16x1xf32>
      %15 = vector.broadcast %14 : vector<16x1xf32> to vector<16x128xf32>
      %16 = arith.mulf %12, %15 : vector<16x128xf32>
      %17 = arith.truncf %16 : vector<16x128xf32> to vector<16x128xbf16>
      %c0_13 = arith.constant 0 : index
      %c0_14 = arith.constant 0 : index
      %18 = vector.load %arg4[%c0_13, %c0_14] : memref<128x128xbf16, #tpu.memory_space<vmem>>, vector<128x128xbf16>
      %cst_15 = arith.constant dense<0.000000e+00> : vector<16x128xf32>
      %19 = tpu.matmul %17, %18, %cst_15 {dimension_numbers = #tpu.dot_dimension_numbers<[1], [0], [0], [1], [0, 0, 1, 1], [], []>} : vector<16x128xbf16>, vector<128x128xbf16>, vector<16x128xf32> -> vector<16x128xf32>
      %c0_16 = arith.constant 0 : index
      %c0_17 = arith.constant 0 : index
      %20 = vector.load %arg5[%c0_16, %c0_17] : memref<1x128xf32, #tpu.memory_space<vmem>>, vector<1x128xf32>
      %21 = vector.broadcast %20 : vector<1x128xf32> to vector<16x128xf32>
      %22 = arith.addf %19, %21 : vector<16x128xf32>
      %23 = math.tanh %22 : vector<16x128xf32>
      %c0_18 = arith.constant 0 : index
      %c0_19 = arith.constant 0 : index
      %24 = vector.load %arg6[%c0_18, %c0_19] : memref<16x128xf32, #tpu.memory_space<vmem>>, vector<16x128xf32>
      tpu.vector_store %arg6[%c0_18, %c0_19], %23 {strides = array<i32>} : memref<16x128xf32, #tpu.memory_space<vmem>>, vector<16x128xf32>,
      %25 = arith.truncf %23 : vector<16x128xf32> to vector<16x128xbf16>
      %26 = vector.extract_strided_slice %25 {offsets = [0, 0], sizes = [8, 128], strides = [1, 1]} : vector<16x128xbf16> to vector<8x128xbf16>
      %27 = vector.extract_strided_slice %25 {offsets = [8, 0], sizes = [8, 128], strides = [1, 1]} : vector<16x128xbf16> to vector<8x128xbf16>
      %cst_20 = arith.constant dense<0.000000e+00> : vector<8x8xf32>
      %28 = tpu.matmul %27, %26, %cst_20 {dimension_numbers = #tpu.dot_dimension_numbers<[1], [1], [0], [0], [0, 0, 1, 0], [], []>} : vector<8x128xbf16>, vector<8x128xbf16>, vector<8x8xf32> -> vector<8x8xf32>
      %cst_21 = arith.constant dense<0xFF800000> : vector<8xf32>
      %29 = vector.multi_reduction <maximumf>, %28, %cst_21 [1] : vector<8x8xf32> to vector<8xf32>
      %30 = vector.shape_cast %29 : vector<8xf32> to vector<8x1xf32>
      %31 = vector.broadcast %30 : vector<8x1xf32> to vector<8x8xf32>
      %32 = arith.subf %28, %31 : vector<8x8xf32>
      %33 = math.exp %32 : vector<8x8xf32>
      %cst_22 = arith.constant dense<0.000000e+00> : vector<8xf32>
      %34 = vector.multi_reduction <add>, %33, %cst_22 [1] : vector<8x8xf32> to vector<8xf32>
      %35 = vector.shape_cast %34 : vector<8xf32> to vector<8x1xf32>
      %36 = math.log %35 : vector<8x1xf32>
      %37 = arith.addf %30, %36 : vector<8x1xf32>
      %38 = tpu.iota {dimensions = array<i32: 0>} : vector<8x8xi32>
      %39 = tpu.iota {dimensions = array<i32: 1>} : vector<8x8xi32>
      %40 = arith.cmpi eq, %38, %39 : vector<8x8xi32>
      %cst_23 = arith.constant 0.000000e+00 : f32
      %41 = vector.broadcast %cst_23 : f32 to vector<8x8xf32>
      %42 = arith.select %40, %28, %41 : vector<8x8xi1>, vector<8x8xf32>
      %cst_24 = arith.constant dense<0.000000e+00> : vector<8xf32>
      %43 = vector.multi_reduction <add>, %42, %cst_24 [1] : vector<8x8xf32> to vector<8xf32>
      %44 = vector.shape_cast %43 : vector<8xf32> to vector<8x1xf32>
      %45 = arith.subf %37, %44 : vector<8x1xf32>
      %46 = vector.shape_cast %45 : vector<8x1xf32> to vector<1x8x1xf32>
      %cst_25 = arith.constant dense<0.000000e+00> : vector<1xf32>
      %47 = vector.multi_reduction <add>, %46, %cst_25 [1, 2] : vector<1x8x1xf32> to vector<1xf32>
      %48 = vector.shape_cast %47 : vector<1xf32> to vector<1x1x1xf32>
      %49 = vector.extract %48[0, 0, 0] : f32 from vector<1x1x1xf32>
      %cst_26 = arith.constant 8.000000e+00 : f32
      %50 = arith.divf %49, %cst_26 : f32
      %c0_27 = arith.constant 0 : index
      %c0_28 = arith.constant 0 : index
      %51 = memref.load %arg7[%c0_27, %c0_28] : memref<1x1xf32, #tpu.memory_space<smem>>
      memref.store %50, %arg7[%c0_27, %c0_28] : memref<1x1xf32, #tpu.memory_space<smem>>
    } else {
    }
    return
  }
  func.func @transform_0(%arg0: i32) -> (i32, i32) {
    %c0_i32 = arith.constant 0 : i32
    %c0_i32_0 = arith.constant 0 : i32
    return %c0_i32, %arg0 : i32, i32
  }
  func.func @transform_1(%arg0: i32) -> (i32, i32) {
    %c0_i32 = arith.constant 0 : i32
    %c0_i32_0 = arith.constant 0 : i32
    %c0_i32_1 = arith.constant 0 : i32
    return %c0_i32, %c0_i32_0 : i32, i32
  }
  func.func @transform_2(%arg0: i32) -> (i32, i32) {
    %c0_i32 = arith.constant 0 : i32
    %c0_i32_0 = arith.constant 0 : i32
    return %arg0, %c0_i32 : i32, i32
  }
  func.func @transform_3(%arg0: i32) -> (i32, i32) {
    %c0_i32 = arith.constant 0 : i32
    %c0_i32_0 = arith.constant 0 : i32
    %c0_i32_1 = arith.constant 0 : i32
    return %c0_i32, %c0_i32_0 : i32, i32
  }
  func.func @transform_4(%arg0: i32) -> (i32, i32) {
    %c0_i32 = arith.constant 0 : i32
    %c0_i32_0 = arith.constant 0 : i32
    %c0_i32_1 = arith.constant 0 : i32
    return %c0_i32, %c0_i32_0 : i32, i32
  }
  func.func @transform_5(%arg0: i32) -> (i32, i32) {
    %c0_i32 = arith.constant 0 : i32
    %c0_i32_0 = arith.constant 0 : i32
    %c0_i32_1 = arith.constant 0 : i32
    return %c0_i32, %c0_i32_0 : i32, i32
  }
  func.func @transform_6(%arg0: i32) -> (i32, i32) {
    %c0_i32 = arith.constant 0 : i32
    %c0_i32_0 = arith.constant 0 : i32
    %c0_i32_1 = arith.constant 0 : i32
    return %c0_i32, %c0_i32_0 : i32, i32
  }
}

</mosaic_0001>

<llo_original>
// kernel: model_forward.1
$region0: #{model_forward.1}
  #allocation0 [shape = 'u32[]', space=smem, size = 0x4, offset = 0x4, fixed_abs, tag = 'smem constant byte address 0x4 - core index']
  #allocation1 [shape = 'u32[72,128]{1,0:T(1,128)}', space=vmem, size = 0x9000, scoped, tag = 'internal scratch']
  #allocation2 [shape = 'f32[16,128]{1,0:T(8,128)}', space=vmem, size = 0x2000, scoped, tag = 'scratch operand']
  %s0 = inlined_call_operand.vmem [shape: bf16[16,512], index: 0, kind: input, shape index: {}]
  %s1 = inlined_call_operand.vmem [shape: f32[16,1], index: 1, kind: input, shape index: {}]
  %s2 = inlined_call_operand.vmem [shape: bf16[512,128], index: 2, kind: input, shape index: {}]
  %s3 = inlined_call_operand.vmem [shape: bf16[128,128], index: 3, kind: input, shape index: {}]
  %s4 = inlined_call_operand.vmem [shape: f32[1,128], index: 4, kind: input, shape index: {}]
  %s5 = inlined_call_operand.vmem [shape: f32[16,128], index: 5, kind: output, shape index: {0}]
  %s6 = inlined_call_operand.hbm [shape: f32[1,1], index: 6, kind: output, shape index: {1}]
  %7 = xla_tuple %s5, %s6
  %s8 = sld [smem:[#allocation0]]
  $region110: #{model_forward.1} parent=0
    _
  %s10 = ssub.s32 1, %s8
  %s11 = scalar_select 0, %s10, %s8
  $region1: #{model_forward.1} parent=0
    #allocation3 [shape = 'u8[8192]{0}', space=vmem, size = 0x2000, scoped, tag = 'input window, operand 0']
    #allocation4 [shape = 'u8[512]{0}', space=smem, size = 0x200, scoped, tag = 'output window, operand 1, single buffered']
    #allocation5 [shape = 's32[2]{0}', space=sflag, size = 0x8, scoped, tag = 'scoped memory for model_forward.1']
    %12 = vsyncpa [#allocation5], 0
    loop: start=0, step=1, limit=6
    $region2: #{model_forward.1} parent=1 // loop_pre_header
      _
    $region3: #{model_forward.1} parent=1 // loop_header
      %s14 = sphi 0, %s18
      %p15 = scmp.ge.s32.totalorder %s14, 6
      %s24 = sphi 0, %s26
      %s27 = sphi 0, %s24
      %s28 = sphi 0, %s27
      %s44 = sphi 0, %s28
      %s48 = sphi 0, %s48
      %s50 = sphi 0, %s48
      %s51 = sphi 0, %s50
      %s65 = sphi 0, %s51
      %s71 = sphi 0, %s73
      %s74 = sphi 0, %s71
      %s75 = sphi 0, %s74
      %s91 = sphi 0, %s75
      %s95 = sphi 0, %s95
      %s97 = sphi 0, %s95
      %s98 = sphi 0, %s97
      %s112 = sphi 0, %s98
      %s116 = sphi 0, %s116
      %s118 = sphi 0, %s116
      %s119 = sphi 0, %s118
      %s133 = sphi 0, %s119
      %s137 = sphi 0, %s137
      %s139 = sphi 0, %s137
      %s140 = sphi 0, %s139
      %s154 = sphi 0, %s140
      %s158 = sphi 0, %s158
      %s160 = sphi 0, %s158
      %s161 = sphi 0, %s160
      %s175 = sphi 0, %s161
    $region4: #{model_forward.1} parent=1 // loop_header_branch
      %17 = sbr.rel (%p15) target = $region8
    $region5: #{model_forward.1} parent=1 // loop_body
      %s19 = ssub.s32 %s14, 1
      %s20 = ssub.s32 %s14, 2
      %s21 = sadd.s32 %s14, 1
      %s22 = ssub.s32 %s14, %s21
      %p23 = scmp.eq.s32.totalorder %s22, 0
      %s25 = sadd.s32 %s24, 1
      %s26 = scalar_select %p23, %s24, %s25
      %p29 = pneg %p23
      %p30 = scmp.eq.s32.totalorder %s14, 3
      %p31 = por %p29, %p30
      %p32 = scmp.ne.s32.totalorder %s24, %s27
      %p33 = scmp.eq.s32.totalorder %s14, 0
      %p34 = por %p32, %p33
      %p35 = scmp.ne.s32.totalorder %s24, %s27
      %p36 = scmp.eq.s32.totalorder %s19, 3
      %p37 = por %p35, %p36
      %p38 = scmp.ne.s32.totalorder %s27, %s28
      %p39 = scmp.eq.s32.totalorder %s19, 0
      %p40 = por %p38, %p39
      %p41 = scmp.ne.s32.totalorder %s27, %s28
      %p42 = scmp.eq.s32.totalorder %s20, 3
      %p43 = por %p41, %p42
      %p45 = scmp.ne.s32.totalorder %s28, %s44
      %p46 = scmp.eq.s32.totalorder %s20, 0
      %p47 = por %p45, %p46
      %s49 = sadd.s32 %s48, 1
      %p52 = scmp.eq.s32.totalorder %s14, 3
      %p53 = scmp.ne.s32.totalorder %s48, %s50
      %p54 = scmp.eq.s32.totalorder %s14, 0
      %p55 = por %p53, %p54
      %p56 = scmp.ne.s32.totalorder %s48, %s50
      %p57 = scmp.eq.s32.totalorder %s19, 3
      %p58 = por %p56, %p57
      %p59 = scmp.ne.s32.totalorder %s50, %s51
      %p60 = scmp.eq.s32.totalorder %s19, 0
      %p61 = por %p59, %p60
      %p62 = scmp.ne.s32.totalorder %s50, %s51
      %p63 = scmp.eq.s32.totalorder %s20, 3
      %p64 = por %p62, %p63
      %p66 = scmp.ne.s32.totalorder %s51, %s65
      %p67 = scmp.eq.s32.totalorder %s20, 0
      %p68 = por %p66, %p67
      %s69 = ssub.s32 %s14, %s21
      %p70 = scmp.eq.s32.totalorder %s69, 0
      %s72 = sadd.s32 %s71, 1
      %s73 = scalar_select %p70, %s71, %s72
      %p76 = pneg %p70
      %p77 = scmp.eq.s32.totalorder %s14, 3
      %p78 = por %p76, %p77
      %p79 = scmp.ne.s32.totalorder %s71, %s74
      %p80 = scmp.eq.s32.totalorder %s14, 0
      %p81 = por %p79, %p80
      %p82 = scmp.ne.s32.totalorder %s71, %s74
      %p83 = scmp.eq.s32.totalorder %s19, 3
      %p84 = por %p82, %p83
      %p85 = scmp.ne.s32.totalorder %s74, %s75
      %p86 = scmp.eq.s32.totalorder %s19, 0
      %p87 = por %p85, %p86
      %p88 = scmp.ne.s32.totalorder %s74, %s75
      %p89 = scmp.eq.s32.totalorder %s20, 3
      %p90 = por %p88, %p89
      %p92 = scmp.ne.s32.totalorder %s75, %s91
      %p93 = scmp.eq.s32.totalorder %s20, 0
      %p94 = por %p92, %p93
      %s96 = sadd.s32 %s95, 1
      %p99 = scmp.eq.s32.totalorder %s14, 3
      %p100 = scmp.ne.s32.totalorder %s95, %s97
      %p101 = scmp.eq.s32.totalorder %s14, 0
      %p102 = por %p100, %p101
      %p103 = scmp.ne.s32.totalorder %s95, %s97
      %p104 = scmp.eq.s32.totalorder %s19, 3
      %p105 = por %p103, %p104
      %p106 = scmp.ne.s32.totalorder %s97, %s98
      %p107 = scmp.eq.s32.totalorder %s19, 0
      %p108 = por %p106, %p107
      %p109 = scmp.ne.s32.totalorder %s97, %s98
      %p110 = scmp.eq.s32.totalorder %s20, 3
      %p111 = por %p109, %p110
      %p113 = scmp.ne.s32.totalorder %s98, %s112
      %p114 = scmp.eq.s32.totalorder %s20, 0
      %p115 = por %p113, %p114
      %s117 = sadd.s32 %s116, 1
      %p120 = scmp.eq.s32.totalorder %s14, 3
      %p121 = scmp.ne.s32.totalorder %s116, %s118
      %p122 = scmp.eq.s32.totalorder %s14, 0
      %p123 = por %p121, %p122
      %p124 = scmp.ne.s32.totalorder %s116, %s118
      %p125 = scmp.eq.s32.totalorder %s19, 3
      %p126 = por %p124, %p125
      %p127 = scmp.ne.s32.totalorder %s118, %s119
      %p128 = scmp.eq.s32.totalorder %s19, 0
      %p129 = por %p127, %p128
      %p130 = scmp.ne.s32.totalorder %s118, %s119
      %p131 = scmp.eq.s32.totalorder %s20, 3
      %p132 = por %p130, %p131
      %p134 = scmp.ne.s32.totalorder %s119, %s133
      %p135 = scmp.eq.s32.totalorder %s20, 0
      %p136 = por %p134, %p135
      %s138 = sadd.s32 %s137, 1
      %p141 = scmp.eq.s32.totalorder %s14, 3
      %p142 = scmp.ne.s32.totalorder %s137, %s139
      %p143 = scmp.eq.s32.totalorder %s14, 0
      %p144 = por %p142, %p143
      %p145 = scmp.ne.s32.totalorder %s137, %s139
      %p146 = scmp.eq.s32.totalorder %s19, 3
      %p147 = por %p145, %p146
      %p148 = scmp.ne.s32.totalorder %s139, %s140
      %p149 = scmp.eq.s32.totalorder %s19, 0
      %p150 = por %p148, %p149
      %p151 = scmp.ne.s32.totalorder %s139, %s140
      %p152 = scmp.eq.s32.totalorder %s20, 3
      %p153 = por %p151, %p152
      %p155 = scmp.ne.s32.totalorder %s140, %s154
      %p156 = scmp.eq.s32.totalorder %s20, 0
      %p157 = por %p155, %p156
      %s159 = sadd.s32 %s158, 1
      %p162 = scmp.eq.s32.totalorder %s14, 3
      %p163 = scmp.ne.s32.totalorder %s158, %s160
      %p164 = scmp.eq.s32.totalorder %s14, 0
      %p165 = por %p163, %p164
      %p166 = scmp.ne.s32.totalorder %s158, %s160
      %p167 = scmp.eq.s32.totalorder %s19, 3
      %p168 = por %p166, %p167
      %p169 = scmp.ne.s32.totalorder %s160, %s161
      %p170 = scmp.eq.s32.totalorder %s19, 0
      %p171 = por %p169, %p170
      %p172 = scmp.ne.s32.totalorder %s160, %s161
      %p173 = scmp.eq.s32.totalorder %s20, 3
      %p174 = por %p172, %p173
      %p176 = scmp.ne.s32.totalorder %s161, %s175
      %p177 = scmp.eq.s32.totalorder %s20, 0
      %p178 = por %p176, %p177
      %p179 = scmp.le.s32.totalorder 1, %s14
      %p180 = scmp.lt.s32.totalorder %s14, 5
      %p181 = pnand %p179, %p180
      %p182 = pneg %p181
      // Predicated region
      $region9: #{model_forward.1} parent=5 // pred_check
        _
      $region10: #{model_forward.1} parent=5 // pred_check_branch
        %184 = sbr.rel (%p181) target = $region12
      $region11: #{model_forward.1} parent=5 // pred_region
        %s185 = ssub.s32 %s14, 1
        // Predicated region
        $region13: #{model_forward.1} parent=11 // pred_check
          %p186 = pneg %p61
        $region14: #{model_forward.1} parent=11 // pred_check_branch
          %188 = sbr.rel (%p186) target = $region16
        $region15: #{model_forward.1} parent=11 // pred_region
          _
        $region16: #{model_forward.1} parent=11 // pred_fallthru
          _
        // Predicated region
        $region17: #{model_forward.1} parent=11 // pred_check
          %p189 = pneg %p108
        $region18: #{model_forward.1} parent=11 // pred_check_branch
          %191 = sbr.rel (%p189) target = $region20
        $region19: #{model_forward.1} parent=11 // pred_region
          _
        $region20: #{model_forward.1} parent=11 // pred_fallthru
          _
        // Predicated region
        $region21: #{model_forward.1} parent=11 // pred_check
          %p192 = pneg %p129
        $region22: #{model_forward.1} parent=11 // pred_check_branch
          %194 = sbr.rel (%p192) target = $region24
        $region23: #{model_forward.1} parent=11 // pred_region
          _
        $region24: #{model_forward.1} parent=11 // pred_fallthru
          _
      $region12: #{model_forward.1} parent=5 // pred_fallthru
        _
      %p195 = scmp.lt.s32.totalorder %s14, 4
      // Predicated region
      $region25: #{model_forward.1} parent=5 // pred_check
        %p196 = pneg %p195
      $region26: #{model_forward.1} parent=5 // pred_check_branch
        %198 = sbr.rel (%p196) target = $region28
      $region27: #{model_forward.1} parent=5 // pred_region
        // Predicated region
        $region29: #{model_forward.1} parent=27 // pred_check
          %p199 = pneg %p34
        $region30: #{model_forward.1} parent=27 // pred_check_branch
          %201 = sbr.rel (%p199) target = $region32
        $region31: #{model_forward.1} parent=27 // pred_region
          %s202 = sand.u32 %s24, 1
          %s203 = sand.u32 %s24, 1
          %s204 = smul.addr %s203, 8
          %s205 = scalar_lea.vmem [#allocation3], %s204
          %s206 = smul.addr %s14, 4
          %s207 = scalar_lea.vmem %s0, %s206
          // Predicated region
          $region33: #{model_forward.1} parent=31 // pred_check
            _
          $region34: #{model_forward.1} parent=31 // pred_check_branch
            %209 = sbr.rel (0) target = $region36
          $region35: #{model_forward.1} parent=31 // pred_region
            // Predicated region
            $region37: #{model_forward.1} parent=35 // pred_check
              _
            $region38: #{model_forward.1} parent=35 // pred_check_branch
              %211 = sbr.rel target = $region40
            $region39: #{model_forward.1} parent=35 // pred_region
              // Predicated region
              $region52: #{model_forward.1} parent=39 // pred_check
                _
              $region53: #{model_forward.1} parent=39 // pred_check_branch
                %229 = sbr.rel (0) target = $region55
              $region54: #{model_forward.1} parent=39 // pred_region
                loop: start=0, step=1, limit=1
                $region56: #{model_forward.1} parent=54 // loop_pre_header
                  _
                $region57: #{model_forward.1} parent=54 // loop_header
                  %s231 = sphi 0, %s235
                  %p232 = scmp.ge.s32.totalorder %s231, 1
                  %s236 = sphi %s207, %s207
                  %s237 = sphi %s205, %s205
                $region58: #{model_forward.1} parent=54 // loop_header_branch
                  %234 = sbr.rel (%p232) target = $region62
                $region59: #{model_forward.1} parent=54 // loop_body
                  _
                $region60: #{model_forward.1} parent=54 // loop_footer
                  %s235 = sadd.s32 1, %s231
                $region61: #{model_forward.1} parent=54 // loop_footer_branch
                  %230 = sbr.rel target = $region57
                $region62: #{model_forward.1} parent=54 // loop_exit
                  _
                %s239 = ssub.s32 16, 1
                loop: start=0, step=1, limit=1
                $region63: #{model_forward.1} parent=54 // loop_pre_header
                  _
                $region64: #{model_forward.1} parent=54 // loop_header
                  %s241 = sphi 0, %s245
                  %p242 = scmp.ge.s32.totalorder %s241, 1
                  %s246 = sphi %s207, %s207
                  %s247 = sphi %s205, %s205
                $region65: #{model_forward.1} parent=54 // loop_header_branch
                  %244 = sbr.rel (%p242) target = $region69
                $region66: #{model_forward.1} parent=54 // loop_body
                  %v248 = vld [vmem:[%s246] sm:%s239]
                  %249 = vst [vmem:[%s247] sm:%s239] %v248
                  %v250 = vld [vmem:[%s246 + $0x10] sm:%s239]
                  %251 = vst [vmem:[%s247 + $0x4] sm:%s239] %v250
                $region67: #{model_forward.1} parent=54 // loop_footer
                  %s245 = sadd.s32 1, %s241
                $region68: #{model_forward.1} parent=54 // loop_footer_branch
                  %240 = sbr.rel target = $region64
                $region69: #{model_forward.1} parent=54 // loop_exit
                  _
              $region55: #{model_forward.1} parent=39 // pred_fallthru
                _
            $region40: #{model_forward.1} parent=35 // pred_fallthru
              _
            // Predicated region
            $region41: #{model_forward.1} parent=35 // pred_check
              _
            $region42: #{model_forward.1} parent=35 // pred_check_branch
              %213 = sbr.rel (0) target = $region44
            $region43: #{model_forward.1} parent=35 // pred_region
              %s215 = ssub.s32 16, 1
              loop: start=0, step=1, limit=1
              $region45: #{model_forward.1} parent=43 // loop_pre_header
                _
              $region46: #{model_forward.1} parent=43 // loop_header
                %s217 = sphi 0, %s221
                %p218 = scmp.ge.s32.totalorder %s217, 1
                %s222 = sphi %s207, %s207
                %s223 = sphi %s205, %s205
              $region47: #{model_forward.1} parent=43 // loop_header_branch
                %220 = sbr.rel (%p218) target = $region51
              $region48: #{model_forward.1} parent=43 // loop_body
                %v224 = vld [vmem:[%s222] sm:%s215]
                %225 = vst [vmem:[%s223] sm:%s215] %v224
                %v226 = vld [vmem:[%s222 + $0x10] sm:%s215]
                %227 = vst [vmem:[%s223 + $0x4] sm:%s215] %v226
              $region49: #{model_forward.1} parent=43 // loop_footer
                %s221 = sadd.s32 1, %s217
              $region50: #{model_forward.1} parent=43 // loop_footer_branch
                %216 = sbr.rel target = $region46
              $region51: #{model_forward.1} parent=43 // loop_exit
                _
            $region44: #{model_forward.1} parent=35 // pred_fallthru
              _
          $region36: #{model_forward.1} parent=31 // pred_fallthru
            _
          %252 = vnop
        $region32: #{model_forward.1} parent=27 // pred_fallthru
          _
        // Predicated region
        $region70: #{model_forward.1} parent=27 // pred_check
          %p253 = pneg %p81
        $region71: #{model_forward.1} parent=27 // pred_check_branch
          %255 = sbr.rel (%p253) target = $region73
        $region72: #{model_forward.1} parent=27 // pred_region
          %s256 = smul.u32 16, %s14
          %p257 = scmp.lt.s32.totalorder %s256, 63
          %s258 = scalar_select %p257, %s256, 63
          %s259 = smul.addr %s258, 4
          %s260 = scalar_lea.vmem %s2, %s259
          %s261 = smul.u32 16, %s14
        $region73: #{model_forward.1} parent=27 // pred_fallthru
          _
      $region28: #{model_forward.1} parent=5 // pred_fallthru
        _
      %p262 = scmp.le.s32.totalorder 1, %s14
      %p263 = scmp.lt.s32.totalorder %s14, 5
      %p264 = pnand %p262, %p263
      %p265 = pneg %p264
      // Predicated region
      $region74: #{model_forward.1} parent=5 // pred_check
        _
      $region75: #{model_forward.1} parent=5 // pred_check_branch
        %267 = sbr.rel (%p264) target = $region77
      $region76: #{model_forward.1} parent=5 // pred_region
        %s268 = ssub.s32 %s14, 1
        %s269 = sand.u32 %s27, 1
        %s270 = sand.u32 %s27, 1
        %s271 = smul.addr %s270, 8
        %s272 = scalar_lea.vmem [#allocation3], %s271
        // Predicated region
        $region78: #{model_forward.1} parent=76 // pred_check
          %p273 = pneg %p40
        $region79: #{model_forward.1} parent=76 // pred_check_branch
          %275 = sbr.rel (%p273) target = $region81
        $region80: #{model_forward.1} parent=76 // pred_region
          _
        $region81: #{model_forward.1} parent=76 // pred_fallthru
          _
        %s276 = sand.u32 %s27, 1
        %s277 = sand.u32 %s27, 1
        %s278 = smul.addr %s277, 8
        %s279 = scalar_lea.vmem [#allocation3], %s278
        %p280 = pneg %p40
        %p281 = pneg %p37
        %p282 = pneg %p61
        %p283 = pneg %p58
        %s284 = smul.u32 16, %s19
        %p285 = scmp.lt.s32.totalorder %s284, 63
        %s286 = scalar_select %p285, %s284, 63
        %s287 = smul.addr %s286, 4
        %s288 = scalar_lea.vmem %s2, %s287
        %p289 = pneg %p87
        %p290 = pneg %p84
        %p291 = pneg %p108
        %p292 = pneg %p105
        %p293 = pneg %p129
        %p294 = pneg %p126
        %p295 = pneg %p150
        %p296 = pneg %p147
        %p297 = pneg %p171
        %p298 = pneg %p168
        %s299 = smul.u32 16, %s19
        %p300 = scmp.lt.s32.totalorder %s299, 63
        %s301 = scalar_select %p300, %s299, 63
        %s302 = smul.addr %s301, 4
        %s303 = scalar_lea.vmem %s2, %s302
        %s304 = smul.u32 16, %s19
        %p306 = scmp.eq.s32.totalorder %s19, 0
        // Predicated region
        $region82: #{model_forward.1} parent=76 // pred_check
          %p307 = pneg %p306
        $region83: #{model_forward.1} parent=76 // pred_check_branch
          %309 = sbr.rel (%p307) target = $region85
        $region84: #{model_forward.1} parent=76 // pred_region
          %310 = vst [vmem:[#allocation2] sm:$0xff] 0.0
          %311 = vst [vmem:[#allocation2 + $0x8] sm:$0xff] 0.0
        $region85: #{model_forward.1} parent=76 // pred_fallthru
          _
        %v312 = vld [vmem:[#allocation2] sm:$0xff]
        %v313 = vld [vmem:[#allocation2 + $0x8] sm:$0xff]
        %v314 = vld [vmem:[%s272] sm:$0xf]
        %v315 = vld [vmem:[%s272 + $0x4] sm:$0xf]
        %v316 = vld [vmem:[%s303] sm:$0xf]
        %v317 = vld [vmem:[%s303 + $0x4] sm:$0xf]
        %v318 = vld [vmem:[%s303 + $0x8] sm:$0xf]
        %v319 = vld [vmem:[%s303 + $0xc] sm:$0xf]
        %v320 = vld [vmem:[%s303 + $0x10] sm:$0xf]
        %v321 = vld [vmem:[%s303 + $0x14] sm:$0xf]
        %v322 = vld [vmem:[%s303 + $0x18] sm:$0xf]
        %v323 = vld [vmem:[%s303 + $0x1c] sm:$0xf]
        %v324 = vld [vmem:[%s303 + $0x20] sm:$0xf]
        %v325 = vld [vmem:[%s303 + $0x24] sm:$0xf]
        %v326 = vld [vmem:[%s303 + $0x28] sm:$0xf]
        %v327 = vld [vmem:[%s303 + $0x2c] sm:$0xf]
        %v328 = vld [vmem:[%s303 + $0x30] sm:$0xf]
        %v329 = vld [vmem:[%s303 + $0x34] sm:$0xf]
        %v330 = vld [vmem:[%s303 + $0x38] sm:$0xf]
        %v331 = vld [vmem:[%s303 + $0x3c] sm:$0xf]
        %v334 = vunpack.c.l.b16 %v314
        %v335 = vunpack.c.l.b16 %v315
        %v336 = vpack.c.b16 %v335, %v334
        %v354 = vunpack.c.l.b16 %v316
        %v355 = vunpack.c.l.b16 %v317
        %v356 = vunpack.c.l.b16 %v318
        %v357 = vunpack.c.l.b16 %v319
        %v358 = vunpack.c.l.b16 %v320
        %v359 = vunpack.c.l.b16 %v321
        %v360 = vunpack.c.l.b16 %v322
        %v361 = vunpack.c.l.b16 %v323
        %v362 = vunpack.c.l.b16 %v324
        %v363 = vunpack.c.l.b16 %v325
        %v364 = vunpack.c.l.b16 %v326
        %v365 = vunpack.c.l.b16 %v327
        %v366 = vunpack.c.l.b16 %v328
        %v367 = vunpack.c.l.b16 %v329
        %v368 = vunpack.c.l.b16 %v330
        %v369 = vunpack.c.l.b16 %v331
        %v370 = vpack.c.b16 %v355, %v354
        %v371 = vpack.c.b16 %v357, %v356
        %v372 = vpack.c.b16 %v359, %v358
        %v373 = vpack.c.b16 %v361, %v360
        %v374 = vpack.c.b16 %v363, %v362
        %v375 = vpack.c.b16 %v365, %v364
        %v376 = vpack.c.b16 %v367, %v366
        %v377 = vpack.c.b16 %v369, %v368
        %386 = vmatpush.bf16.msra.mxu0 %v377
        %387 = vmatpush.bf16.msra.mxu0 %v376
        %388 = vmatpush.bf16.msra.mxu0 %v375
        %389 = vmatpush.bf16.msra.mxu0 %v374
        %390 = vmatpush.bf16.msra.mxu0 %v373
        %391 = vmatpush.bf16.msra.mxu0 %v372
        %392 = vmatpush.bf16.msra.mxu0 %v371
        %393 = vmatpush.bf16.msra.mxu0 %v370
        %394 = vmatmul.bf16.gmra.mxu0 %v336
        %v395 = vpop.f32.mrf.mxu0
        %v396 = vadd.f32 0.0, %v395
        %v397 = vpop.f32.mrf.mxu0
        %v398 = vadd.f32 0.0, %v397
        %399 = vdwg.mxu0
        %v400 = vadd.f32 %v312, %v396
        %v401 = vadd.f32 %v313, %v398
        %402 = vst [vmem:[#allocation2] sm:$0xff] %v400
        %403 = vst [vmem:[#allocation2 + $0x8] sm:$0xff] %v401
        %p404 = scmp.eq.s32.totalorder %s19, 3
        // Predicated region
        $region86: #{model_forward.1} parent=76 // pred_check
          %p405 = pneg %p404
        $region87: #{model_forward.1} parent=76 // pred_check_branch
          %407 = sbr.rel (%p405) target = $region89
        $region88: #{model_forward.1} parent=76 // pred_region
          %v408 = vld [vmem:[#allocation2] sm:$0xff]
          %v409 = vld [vmem:[#allocation2 + $0x8] sm:$0xff]
          %v410 = vld [vmem:[%s1] sm:$0xff]
          %v411 = vld [vmem:[%s1 + $0x8] sm:$0xff]
          %v412 = vrcp.pop %v410
          %v413 = vmul.f32 %v410, %v412
          %v414 = vsub.f32 1.0, %v413
          %v415 = vmul.f32 %v412, %v414
          %v416 = vadd.f32 %v412, %v415
          %vm417 = vweird.f32 %v410
          %vm418 = vweird.f32 %v412
          %vm419 = vmor %vm417, %vm418
          %v420 = vsel %vm419, %v412, %v416
          %v421 = vand.u32 2147483647, %v410
          %vm422 = vcmp.eq.f32.partialorder %v421, 8.507059e+37
          %v423 = vand.u32 %v410, 2147483648
          %v424 = vor.u32 1.1754944e-38, %v423
          %v425 = vsel %vm422, %v424, %v420
          %v426 = vrcp.pop %v411
          %v427 = vmul.f32 %v411, %v426
          %v428 = vsub.f32 1.0, %v427
          %v429 = vmul.f32 %v426, %v428
          %v430 = vadd.f32 %v426, %v429
          %vm431 = vweird.f32 %v411
          %vm432 = vweird.f32 %v426
          %vm433 = vmor %vm431, %vm432
          %v434 = vsel %vm433, %v426, %v430
          %v435 = vand.u32 2147483647, %v411
          %vm436 = vcmp.eq.f32.partialorder %v435, 8.507059e+37
          %v437 = vand.u32 %v411, 2147483648
          %v438 = vor.u32 1.1754944e-38, %v437
          %v439 = vsel %vm436, %v438, %v434
          %441 = vset.pattern.permute.xlu0 0
          %442 = vperm.xlu0 %441, %v425
          %v443 = vpop.permute.xlu0 %442
          %446 = vset.pattern.permute.xlu0 0
          %447 = vperm.xlu0 %446, %v439
          %v448 = vpop.permute.xlu0 %447
          %v450 = vmul.f32 %v408, %v443
          %v451 = vmul.f32 %v409, %v448
          %v452 = vpack.c.bf16 %v451, %v450
          %v453 = vld [vmem:[%s3] sm:$0xf]
          %v454 = vld [vmem:[%s3 + $0x4] sm:$0xf]
          %v455 = vld [vmem:[%s3 + $0x8] sm:$0xf]
          %v456 = vld [vmem:[%s3 + $0xc] sm:$0xf]
          %v457 = vld [vmem:[%s3 + $0x10] sm:$0xf]
          %v458 = vld [vmem:[%s3 + $0x14] sm:$0xf]
          %v459 = vld [vmem:[%s3 + $0x18] sm:$0xf]
          %v460 = vld [vmem:[%s3 + $0x1c] sm:$0xf]
          %v461 = vld [vmem:[%s3 + $0x20] sm:$0xf]
          %v462 = vld [vmem:[%s3 + $0x24] sm:$0xf]
          %v463 = vld [vmem:[%s3 + $0x28] sm:$0xf]
          %v464 = vld [vmem:[%s3 + $0x2c] sm:$0xf]
          %v465 = vld [vmem:[%s3 + $0x30] sm:$0xf]
          %v466 = vld [vmem:[%s3 + $0x34] sm:$0xf]
          %v467 = vld [vmem:[%s3 + $0x38] sm:$0xf]
          %v468 = vld [vmem:[%s3 + $0x3c] sm:$0xf]
          %v469 = vld [vmem:[%s4] sm:$0x1]
          %v471 = vperm.slane %v469, 0
          %v489 = vunpack.c.l.b16 %v453
          %v490 = vunpack.c.l.b16 %v454
          %v491 = vunpack.c.l.b16 %v455
          %v492 = vunpack.c.l.b16 %v456
          %v493 = vunpack.c.l.b16 %v457
          %v494 = vunpack.c.l.b16 %v458
          %v495 = vunpack.c.l.b16 %v459
          %v496 = vunpack.c.l.b16 %v460
          %v497 = vunpack.c.l.b16 %v461
          %v498 = vunpack.c.l.b16 %v462
          %v499 = vunpack.c.l.b16 %v463
          %v500 = vunpack.c.l.b16 %v464
          %v501 = vunpack.c.l.b16 %v465
          %v502 = vunpack.c.l.b16 %v466
          %v503 = vunpack.c.l.b16 %v467
          %v504 = vunpack.c.l.b16 %v468
          %v505 = vpack.c.b16 %v490, %v489
          %v506 = vpack.c.b16 %v492, %v491
          %v507 = vpack.c.b16 %v494, %v493
          %v508 = vpack.c.b16 %v496, %v495
          %v509 = vpack.c.b16 %v498, %v497
          %v510 = vpack.c.b16 %v500, %v499
          %v511 = vpack.c.b16 %v502, %v501
          %v512 = vpack.c.b16 %v504, %v503
          %521 = vmatpush.bf16.msra.mxu0 %v512
          %522 = vmatpush.bf16.msra.mxu0 %v511
          %523 = vmatpush.bf16.msra.mxu0 %v510
          %524 = vmatpush.bf16.msra.mxu0 %v509
          %525 = vmatpush.bf16.msra.mxu0 %v508
          %526 = vmatpush.bf16.msra.mxu0 %v507
          %527 = vmatpush.bf16.msra.mxu0 %v506
          %528 = vmatpush.bf16.msra.mxu0 %v505
          %529 = vmatmul.bf16.gmra.mxu0 %v452
          %v530 = vpop.f32.mrf.mxu0
          %v531 = vadd.f32 %v471, %v530
          %v532 = vpop.f32.mrf.mxu0
          %v533 = vadd.f32 %v471, %v532
          %534 = vdwg.mxu0
          %v535 = vtanh.pop %v531
          %v536 = vtanh.pop %v533
          %537 = vst [vmem:[%s5] sm:$0xff] %v535
          %538 = vst [vmem:[%s5 + $0x8] sm:$0xff] %v536
          %v539 = vpack.c.bf16 %v535, %v535
          %v540 = vpack.c.bf16 %v536, %v536
          %541 = vmatpush.bf16.xpose.msra.mxu0 0
          %542 = vmatpush.bf16.xpose.msra.mxu0 0
          %543 = vmatpush.bf16.xpose.msra.mxu0 0
          %544 = vmatpush.bf16.xpose.msra.mxu0 0
          %545 = vmatpush.bf16.xpose.msra.mxu0 0
          %546 = vmatpush.bf16.xpose.msra.mxu0 0
          %547 = vmatpush.bf16.xpose.msra.mxu0 0
          %548 = vmatpush.bf16.xpose.msra.mxu0 %v539
          %549 = vmatmul.bf16.gmra.mxu0 %v540
          %v550 = vpop.f32.mrf.mxu0
          %v551 = vadd.f32 0.0, %v550
          %v552 = vpop.f32.mrf.mxu0
          %553 = vdwg.mxu0
          %vm554 = vcmask 64512
          %v555 = vsel %vm554, %v551, -inf
          %556 = vmax.xlane.f32.xlu0 %v555
          %v557 = vpop.xlane.xlu0 %556
          %v558 = vsub.f32 %v551, %v557
          %v559 = vmul.f32 %v558, 1.442695
          %v560 = vpow.pop %v559
          %v561 = vsel %vm554, %v560, 0.0
          %562 = vadd.xlane.f32.xlu0 %v561
          %v563 = vpop.xlane.xlu0 %562
          %v564 = vlog2.pop %v563
          %v565 = vmul.f32 %v564, 0.6931472
          %v566 = vadd.f32 %v557, %v565
          %v567 = vlaneseq
          %v568 = vshrl.u32 %v567, 7
          %v569 = vlaneseq
          %v570 = vand.u32 %v569, 127
          %vm571 = vcmp.eq.s32.totalorder %v568, %v570
          %v572 = vsel %vm571, %v551, 0.0
          %v573 = vsel %vm554, %v572, 0.0
          %574 = vadd.xlane.f32.xlu0 %v573
          %v575 = vpop.xlane.xlu0 %574
          %v576 = vsub.f32 %v566, %v575
          %vm577 = vcmask 7168
          %v578 = vsel %vm577, %v576, 0.0
          %579 = vadd.xlane.f32.xlu0 %v578
          %v580 = vpop.xlane.xlu0 %579
          %v581 = vrot.slane %v580, 4
          %v582 = vadd.f32 %v580, %v581
          %v583 = vrot.slane %v582, 2
          %v584 = vadd.f32 %v582, %v583
          %v585 = vrot.slane %v584, 1
          %v586 = vadd.f32 %v584, %v585
          %s587 = vtos %v586
          %v588 = vrcp.pop 8.0
          %v589 = vmul.f32 8.0, %v588
          %v590 = vsub.f32 1.0, %v589
          %v591 = vmul.f32 %v588, %v590
          %v592 = vadd.f32 %v588, %v591
          %vm593 = vweird.f32 %v588
          %v594 = vsel %vm593, %v588, %v592
          %s595 = vtos %v594
          %s596 = smul.f32 %s587, %s595
          %s597 = scalar_lea.smem [#allocation4], 0
          %598 = sst [smem:[%s597]] %s596
        $region89: #{model_forward.1} parent=76 // pred_fallthru
          _
        // Predicated region
        $region90: #{model_forward.1} parent=76 // pred_check
          %p599 = pneg %p147
        $region91: #{model_forward.1} parent=76 // pred_check_branch
          %601 = sbr.rel (%p599) target = $region93
        $region92: #{model_forward.1} parent=76 // pred_region
          _
        $region93: #{model_forward.1} parent=76 // pred_fallthru
          _
        // Predicated region
        $region94: #{model_forward.1} parent=76 // pred_check
          %p602 = pneg %p168
        $region95: #{model_forward.1} parent=76 // pred_check_branch
          %604 = sbr.rel (%p602) target = $region97
        $region96: #{model_forward.1} parent=76 // pred_region
          %606 = vsyncadd [#allocation5], 0
          %s608 = sshll.u32 %s6, 4
          %s609 = int_to_ptr.hbm [resolvable:$true] %s608
          %611 = dma.smem_to_hbm [#allocation4], 16, %s609, [#allocation5]
        $region97: #{model_forward.1} parent=76 // pred_fallthru
          _
        // Predicated region
        $region98: #{model_forward.1} parent=76 // pred_check
          %p612 = pneg %p147
        $region99: #{model_forward.1} parent=76 // pred_check_branch
          %614 = sbr.rel (%p612) target = $region101
        $region100: #{model_forward.1} parent=76 // pred_region
          _
        $region101: #{model_forward.1} parent=76 // pred_fallthru
          _
        // Predicated region
        $region102: #{model_forward.1} parent=76 // pred_check
          %p615 = pneg %p168
        $region103: #{model_forward.1} parent=76 // pred_check_branch
          %617 = sbr.rel (%p615) target = $region105
        $region104: #{model_forward.1} parent=76 // pred_region
          %619 = dma.done [#allocation5], 16
        $region105: #{model_forward.1} parent=76 // pred_fallthru
          _
        %620 = sfence
      $region77: #{model_forward.1} parent=5 // pred_fallthru
        _
      %p621 = scmp.le.s32.totalorder 2, %s14
      // Predicated region
      $region106: #{model_forward.1} parent=5 // pred_check
        %p622 = pneg %p621
      $region107: #{model_forward.1} parent=5 // pred_check_branch
        %624 = sbr.rel (%p622) target = $region109
      $region108: #{model_forward.1} parent=5 // pred_region
        %s625 = ssub.s32 %s14, 2
      $region109: #{model_forward.1} parent=5 // pred_fallthru
        _
    $region6: #{model_forward.1} parent=1 // loop_footer
      %s18 = sadd.s32 1, %s14
    $region7: #{model_forward.1} parent=1 // loop_footer_branch
      %13 = sbr.rel target = $region3
    $region8: #{model_forward.1} parent=1 // loop_exit
      _
    %626 = vsyncpa [#allocation5], 1
    %s627 = scalar_lea.sflag [#allocation5], 1
    %628 = vsyncpa %s627, 1

</llo_original>
